<compile_context>
chip_gen: v5e
topology: v5e:2x2
jax: 0.10.0
libtpu: 0.0.40
codegen_flags: <defaults>
</compile_context>

<pallas_src>
import jax
import jax.numpy as jnp
from jax.experimental import pallas as pl
from jax.experimental.pallas import tpu as pltpu


def _actor_kernel(xT_ref,                      # (S, TB)  matmul dtype
                  w1_ref, b1_ref,              # (H, S), (H, 1)
                  w2_ref, b2_ref,              # (H, H), (H, 1)
                  w3_ref, b3_ref,              # (A, H), (A, 1)
                  act_ref,                     # (1, TB) int32, lane-major
                  gum_ref,                     # (A, TB) f32 Gumbel noise
                  pi_ref, logp_pi_ref, logp_a_ref):   # (1, TB) each
    xT = xT_ref[...]

    # ---- MLP hot path, transposed: y^T = W @ x^T + b  (batch on lanes) ----
    h = jnp.tanh(jnp.dot(w1_ref[...], xT,
                         preferred_element_type=jnp.float32) + b1_ref[...])
    h = jnp.tanh(jnp.dot(w2_ref[...], h.astype(w2_ref.dtype),
                         preferred_element_type=jnp.float32) + b2_ref[...])
    logitsT = jnp.dot(w3_ref[...], h.astype(w3_ref.dtype),
                      preferred_element_type=jnp.float32) + b3_ref[...]  # (A, TB)

    # ---- log_softmax over the action axis (sublanes), f32 ----
    m = jnp.max(logitsT, axis=0, keepdims=True)
    z = logitsT - m
    lse = jnp.log(jnp.sum(jnp.exp(z), axis=0, keepdims=True))
    logp_allT = z - lse                                                   # (A, TB)

    A = logp_allT.shape[0]
    row = jax.lax.broadcasted_iota(jnp.int32, logp_allT.shape, 0)         # (A, TB)

    # ---- categorical sample (multinomial, 1 draw) via Gumbel-max ----
    scores = logp_allT + gum_ref[...]
    smax = jnp.max(scores, axis=0, keepdims=True)
    pi = jnp.min(jnp.where(scores >= smax, row, A), axis=0, keepdims=True)  # (1,TB)

    # ---- log-prob gathers via one-hot masks (sublane reduce) ----
    logp_pi = jnp.sum(jnp.where(row == pi, logp_allT, 0.0),
                      axis=0, keepdims=True)                               # (1,TB)
    logp_a = jnp.sum(jnp.where(row == act_ref[...], logp_allT, 0.0),
                     axis=0, keepdims=True)                                # (1,TB)

    pi_ref[...] = pi.astype(jnp.int32)
    logp_pi_ref[...] = logp_pi
    logp_a_ref[...] = logp_a


def _round_up(x, m):
    return ((x + m - 1) // m) * m


def discrete_actor_forward(state, action, params, rng_key, *,
                           tile_b=512, matmul_dtype=jnp.bfloat16):
    """state: (B, S) f32; action: (B,) int; returns (pi, logp_pi, logp_a), each (B,)."""
    B, S = state.shape
    H = params["w1"].shape[0]
    A = params["w3"].shape[0]

    # Batch tile: lane-dense (multiple of 128), capped at `tile_b` (sized for
    # v7x's 64 MiB VMEM with huge headroom — per-tile footprint is tens of KB).
    tb = min(tile_b, _round_up(max(B, 1), 128))
    tb = max(128, (tb // 128) * 128)
    B_pad = _round_up(B, tb)
    grid = (pl.cdiv(B_pad, tb),)

    # Lane-major, padded inputs (padding rows are discarded after the call).
    state_p = jnp.zeros((B_pad, S), jnp.float32).at[:B].set(
        state.astype(jnp.float32))
    stateT = state_p.T.astype(matmul_dtype)                      # (S, B_pad)
    act_row = jnp.zeros((1, B_pad), jnp.int32).at[0, :B].set(
        action.astype(jnp.int32))                                # (1, B_pad)
    gumbel = jax.random.gumbel(rng_key, (A, B_pad), dtype=jnp.float32)

    w1 = params["w1"].astype(matmul_dtype)
    w2 = params["w2"].astype(matmul_dtype)
    w3 = params["w3"].astype(matmul_dtype)
    b1, b2, b3 = params["b1"], params["b2"], params["b3"]        # f32 (·,1)

    pinned = lambda shape: pl.BlockSpec(shape, lambda i: (0, 0))
    tiled = lambda rows: pl.BlockSpec((rows, tb), lambda i: (0, i))

    pi, logp_pi, logp_a = pl.pallas_call(
        _actor_kernel,
        grid=grid,
        in_specs=[
            tiled(S),                       # state^T
            pinned((H, S)), pinned((H, 1)),  # l1
            pinned((H, H)), pinned((H, 1)),  # l2
            pinned((A, H)), pinned((A, 1)),  # logits layer
            tiled(1),                        # action (lane-major)
            tiled(A),                        # gumbel noise
        ],
        out_specs=(tiled(1), tiled(1), tiled(1)),
        out_shape=(
            jax.ShapeDtypeStruct((1, B_pad), jnp.int32),
            jax.ShapeDtypeStruct((1, B_pad), jnp.float32),
            jax.ShapeDtypeStruct((1, B_pad), jnp.float32),
        ),
        compiler_params=pltpu.CompilerParams(
            dimension_semantics=("parallel",),
            vmem_limit_bytes=32 * 1024 * 1024,
        ),
    )(stateT, w1, b1, w2, b2, w3, b3, act_row, gumbel)

    return pi[0, :B], logp_pi[0, :B], logp_a[0, :B]


# ---------------- deterministic parameter init (mirrors weight_init) ---------
def _orthogonal(key, out_dim, in_dim):
    """Orthogonal init like nn.init.orthogonal_ (gain=1) for a (out, in) weight."""
    n, m = max(out_dim, in_dim), min(out_dim, in_dim)
    a = jax.random.normal(key, (n, m), dtype=jnp.float32)
    q, r = jnp.linalg.qr(a)
    q = q * jnp.sign(jnp.diagonal(r))
    w = q if out_dim >= in_dim else q.T
    return w[:out_dim, :in_dim]


def make_params(key, state_dim, action_dim, hidden_dim):
    k1, k2, k3 = jax.random.split(key, 3)
    # PyTorch Linear layout (out, in); biases as (out, 1) columns for the
    # transposed (batch-on-lanes) kernel formulation.
    return {
        "w1": _orthogonal(k1, hidden_dim, state_dim),
        "b1": jnp.zeros((hidden_dim, 1), jnp.float32),
        "w2": _orthogonal(k2, hidden_dim, hidden_dim),
        "b2": jnp.zeros((hidden_dim, 1), jnp.float32),
        "w3": _orthogonal(k3, action_dim, hidden_dim),
        "b3": jnp.zeros((action_dim, 1), jnp.float32),
    }


def _reference_logp_all(state, p):
    """Pure-JAX f32 reference of the deterministic part of the forward pass."""
    h = jnp.tanh(state @ p["w1"].T + p["b1"][:, 0])
    h = jnp.tanh(h @ p["w2"].T + p["b2"][:, 0])
    logits = h @ p["w3"].T + p["b3"][:, 0]
    return jax.nn.log_softmax(logits, axis=-1)


if __name__ == "__main__":
    B, STATE_DIM, ACTION_DIM, HIDDEN = 8, 16, 8, 64

    key = jax.random.PRNGKey(0)
    k_param, k_state, k_act, k_sample = jax.random.split(key, 4)

    params = make_params(k_param, STATE_DIM, ACTION_DIM, HIDDEN)
    state = jax.random.normal(k_state, (B, STATE_DIM), dtype=jnp.float32)
    action = jax.random.randint(k_act, (B,), 0, ACTION_DIM, dtype=jnp.int32)

    pi, logp_pi, logp_a = discrete_actor_forward(state, action, params, k_sample)
    jax.block_until_ready((pi, logp_pi, logp_a))

    # sanity: shapes, ranges, non-positive log-probs
    assert pi.shape == (B,) and logp_pi.shape == (B,) and logp_a.shape == (B,)
    assert bool(jnp.all((pi >= 0) & (pi < ACTION_DIM)))
    assert bool(jnp.all(logp_pi <= 0.0)) and bool(jnp.all(logp_a <= 0.0))

    # numerical check against a pure-JAX f32 reference (bf16 MXU tolerance).
    # TODO(synk): torch.multinomial RNG stream itself cannot be reproduced;
    # sampling is distribution-equivalent Gumbel-max, so we validate log-probs
    # at the kernel's sampled indices rather than the sample values.
    lp_ref = _reference_logp_all(state, params)
    idx = jnp.arange(B)
    assert bool(jnp.allclose(logp_a, lp_ref[idx, action], atol=5e-2, rtol=5e-2))
    assert bool(jnp.allclose(logp_pi, lp_ref[idx, pi], atol=5e-2, rtol=5e-2))

    print("KERNEL_OK")
</pallas_src>

<mosaic_0001>
module attributes {stable_mosaic.version = 11 : i64} {
  func.func @_actor_kernel(%arg0: i32, %arg1: memref<16x128xbf16, #tpu.memory_space<vmem>>, %arg2: memref<64x16xbf16, #tpu.memory_space<vmem>>, %arg3: memref<64x1xf32, #tpu.memory_space<vmem>>, %arg4: memref<64x64xbf16, #tpu.memory_space<vmem>>, %arg5: memref<64x1xf32, #tpu.memory_space<vmem>>, %arg6: memref<8x64xbf16, #tpu.memory_space<vmem>>, %arg7: memref<8x1xf32, #tpu.memory_space<vmem>>, %arg8: memref<1x128xi32, #tpu.memory_space<vmem>>, %arg9: memref<8x128xf32, #tpu.memory_space<vmem>>, %arg10: memref<1x128xi32, #tpu.memory_space<vmem>>, %arg11: memref<1x128xf32, #tpu.memory_space<vmem>>, %arg12: memref<1x128xf32, #tpu.memory_space<vmem>>) attributes {dimension_semantics = [#tpu.dimension_semantics<parallel>], iteration_bounds = array<i64: 1>, scalar_prefetch = 0 : i64, scratch_operands = 0 : i64, tpu.core_type = #tpu.core_type<tc>, window_params = [{transform_indices = @transform_0, window_bounds = array<i64: 16, 128>}, {pipeline_mode = #tpu.pipeline_mode<synchronous>, transform_indices = @transform_1, window_bounds = array<i64: 64, 16>}, {pipeline_mode = #tpu.pipeline_mode<synchronous>, transform_indices = @transform_2, window_bounds = array<i64: 64, 1>}, {pipeline_mode = #tpu.pipeline_mode<synchronous>, transform_indices = @transform_3, window_bounds = array<i64: 64, 64>}, {pipeline_mode = #tpu.pipeline_mode<synchronous>, transform_indices = @transform_4, window_bounds = array<i64: 64, 1>}, {pipeline_mode = #tpu.pipeline_mode<synchronous>, transform_indices = @transform_5, window_bounds = array<i64: 8, 64>}, {pipeline_mode = #tpu.pipeline_mode<synchronous>, transform_indices = @transform_6, window_bounds = array<i64: 8, 1>}, {transform_indices = @transform_7, window_bounds = array<i64: 1, 128>}, {transform_indices = @transform_8, window_bounds = array<i64: 8, 128>}, {transform_indices = @transform_9, window_bounds = array<i64: 1, 128>}, {transform_indices = @transform_10, window_bounds = array<i64: 1, 128>}, {transform_indices = @transform_11, window_bounds = array<i64: 1, 128>}]} {
    %c0 = arith.constant 0 : index
    %c0_0 = arith.constant 0 : index
    %0 = vector.load %arg1[%c0, %c0_0] : memref<16x128xbf16, #tpu.memory_space<vmem>>, vector<16x128xbf16>
    %c0_1 = arith.constant 0 : index
    %c0_2 = arith.constant 0 : index
    %1 = vector.load %arg2[%c0_1, %c0_2] : memref<64x16xbf16, #tpu.memory_space<vmem>>, vector<64x16xbf16>
    %cst = arith.constant dense<0.000000e+00> : vector<64x128xf32>
    %2 = tpu.matmul %1, %0, %cst {dimension_numbers = #tpu.dot_dimension_numbers<[1], [0], [0], [1], [0, 0, 1, 1], [], []>} : vector<64x16xbf16>, vector<16x128xbf16>, vector<64x128xf32> -> vector<64x128xf32>
    %c0_3 = arith.constant 0 : index
    %c0_4 = arith.constant 0 : index
    %3 = vector.load %arg3[%c0_3, %c0_4] : memref<64x1xf32, #tpu.memory_space<vmem>>, vector<64x1xf32>
    %4 = vector.broadcast %3 : vector<64x1xf32> to vector<64x128xf32>
    %5 = arith.addf %2, %4 : vector<64x128xf32>
    %6 = math.tanh %5 : vector<64x128xf32>
    %c0_5 = arith.constant 0 : index
    %c0_6 = arith.constant 0 : index
    %7 = vector.load %arg4[%c0_5, %c0_6] : memref<64x64xbf16, #tpu.memory_space<vmem>>, vector<64x64xbf16>
    %8 = arith.truncf %6 : vector<64x128xf32> to vector<64x128xbf16>
    %cst_7 = arith.constant dense<0.000000e+00> : vector<64x128xf32>
    %9 = tpu.matmul %7, %8, %cst_7 {dimension_numbers = #tpu.dot_dimension_numbers<[1], [0], [0], [1], [0, 0, 1, 1], [], []>} : vector<64x64xbf16>, vector<64x128xbf16>, vector<64x128xf32> -> vector<64x128xf32>
    %c0_8 = arith.constant 0 : index
    %c0_9 = arith.constant 0 : index
    %10 = vector.load %arg5[%c0_8, %c0_9] : memref<64x1xf32, #tpu.memory_space<vmem>>, vector<64x1xf32>
    %11 = vector.broadcast %10 : vector<64x1xf32> to vector<64x128xf32>
    %12 = arith.addf %9, %11 : vector<64x128xf32>
    %13 = math.tanh %12 : vector<64x128xf32>
    %c0_10 = arith.constant 0 : index
    %c0_11 = arith.constant 0 : index
    %14 = vector.load %arg6[%c0_10, %c0_11] : memref<8x64xbf16, #tpu.memory_space<vmem>>, vector<8x64xbf16>
    %15 = arith.truncf %13 : vector<64x128xf32> to vector<64x128xbf16>
    %cst_12 = arith.constant dense<0.000000e+00> : vector<8x128xf32>
    %16 = tpu.matmul %14, %15, %cst_12 {dimension_numbers = #tpu.dot_dimension_numbers<[1], [0], [0], [1], [0, 0, 1, 1], [], []>} : vector<8x64xbf16>, vector<64x128xbf16>, vector<8x128xf32> -> vector<8x128xf32>
    %c0_13 = arith.constant 0 : index
    %c0_14 = arith.constant 0 : index
    %17 = vector.load %arg7[%c0_13, %c0_14] : memref<8x1xf32, #tpu.memory_space<vmem>>, vector<8x1xf32>
    %18 = vector.broadcast %17 : vector<8x1xf32> to vector<8x128xf32>
    %19 = arith.addf %16, %18 : vector<8x128xf32>
    %cst_15 = arith.constant dense<0xFF800000> : vector<128xf32>
    %20 = vector.multi_reduction <maximumf>, %19, %cst_15 [0] : vector<8x128xf32> to vector<128xf32>
    %21 = vector.shape_cast %20 : vector<128xf32> to vector<1x128xf32>
    %22 = vector.broadcast %21 : vector<1x128xf32> to vector<8x128xf32>
    %23 = arith.subf %19, %22 : vector<8x128xf32>
    %24 = math.exp %23 : vector<8x128xf32>
    %cst_16 = arith.constant dense<0.000000e+00> : vector<128xf32>
    %25 = vector.multi_reduction <add>, %24, %cst_16 [0] : vector<8x128xf32> to vector<128xf32>
    %26 = vector.shape_cast %25 : vector<128xf32> to vector<1x128xf32>
    %27 = math.log %26 : vector<1x128xf32>
    %28 = vector.broadcast %27 : vector<1x128xf32> to vector<8x128xf32>
    %29 = arith.subf %23, %28 : vector<8x128xf32>
    %30 = tpu.iota {dimensions = array<i32: 0>} : vector<8x128xi32>
    %c0_17 = arith.constant 0 : index
    %c0_18 = arith.constant 0 : index
    %31 = vector.load %arg9[%c0_17, %c0_18] : memref<8x128xf32, #tpu.memory_space<vmem>>, vector<8x128xf32>
    %32 = arith.addf %29, %31 : vector<8x128xf32>
    %cst_19 = arith.constant dense<0xFF800000> : vector<128xf32>
    %33 = vector.multi_reduction <maximumf>, %32, %cst_19 [0] : vector<8x128xf32> to vector<128xf32>
    %34 = vector.shape_cast %33 : vector<128xf32> to vector<1x128xf32>
    %35 = vector.broadcast %34 : vector<1x128xf32> to vector<8x128xf32>
    %36 = arith.cmpf oge, %32, %35 : vector<8x128xf32>
    %c8_i32 = arith.constant 8 : i32
    %37 = vector.broadcast %c8_i32 : i32 to vector<8x128xi32>
    %38 = arith.select %36, %30, %37 : vector<8x128xi1>, vector<8x128xi32>
    %cst_20 = arith.constant dense<2147483647> : vector<128xi32>
    %39 = vector.multi_reduction <minsi>, %38, %cst_20 [0] : vector<8x128xi32> to vector<128xi32>
    %40 = vector.shape_cast %39 : vector<128xi32> to vector<1x128xi32>
    %41 = vector.broadcast %40 : vector<1x128xi32> to vector<8x128xi32>
    %42 = arith.cmpi eq, %30, %41 : vector<8x128xi32>
    %cst_21 = arith.constant 0.000000e+00 : f32
    %43 = vector.broadcast %cst_21 : f32 to vector<8x128xf32>
    %44 = arith.select %42, %29, %43 : vector<8x128xi1>, vector<8x128xf32>
    %cst_22 = arith.constant dense<0.000000e+00> : vector<128xf32>
    %45 = vector.multi_reduction <add>, %44, %cst_22 [0] : vector<8x128xf32> to vector<128xf32>
    %46 = vector.shape_cast %45 : vector<128xf32> to vector<1x128xf32>
    %c0_23 = arith.constant 0 : index
    %c0_24 = arith.constant 0 : index
    %47 = vector.load %arg8[%c0_23, %c0_24] : memref<1x128xi32, #tpu.memory_space<vmem>>, vector<1x128xi32>
    %48 = vector.broadcast %47 : vector<1x128xi32> to vector<8x128xi32>
    %49 = arith.cmpi eq, %30, %48 : vector<8x128xi32>
    %cst_25 = arith.constant 0.000000e+00 : f32
    %50 = vector.broadcast %cst_25 : f32 to vector<8x128xf32>
    %51 = arith.select %49, %29, %50 : vector<8x128xi1>, vector<8x128xf32>
    %cst_26 = arith.constant dense<0.000000e+00> : vector<128xf32>
    %52 = vector.multi_reduction <add>, %51, %cst_26 [0] : vector<8x128xf32> to vector<128xf32>
    %53 = vector.shape_cast %52 : vector<128xf32> to vector<1x128xf32>
    %c0_27 = arith.constant 0 : index
    %c0_28 = arith.constant 0 : index
    %54 = vector.load %arg10[%c0_27, %c0_28] : memref<1x128xi32, #tpu.memory_space<vmem>>, vector<1x128xi32>
    tpu.vector_store %arg10[%c0_27, %c0_28], %40 {strides = array<i32>} : memref<1x128xi32, #tpu.memory_space<vmem>>, vector<1x128xi32>,
    %c0_29 = arith.constant 0 : index
    %c0_30 = arith.constant 0 : index
    %55 = vector.load %arg11[%c0_29, %c0_30] : memref<1x128xf32, #tpu.memory_space<vmem>>, vector<1x128xf32>
    tpu.vector_store %arg11[%c0_29, %c0_30], %46 {strides = array<i32>} : memref<1x128xf32, #tpu.memory_space<vmem>>, vector<1x128xf32>,
    %c0_31 = arith.constant 0 : index
    %c0_32 = arith.constant 0 : index
    %56 = vector.load %arg12[%c0_31, %c0_32] : memref<1x128xf32, #tpu.memory_space<vmem>>, vector<1x128xf32>
    tpu.vector_store %arg12[%c0_31, %c0_32], %53 {strides = array<i32>} : memref<1x128xf32, #tpu.memory_space<vmem>>, vector<1x128xf32>,
    return
  }
  func.func @transform_0(%arg0: i32) -> (i32, i32) {
    %c0_i32 = arith.constant 0 : i32
    %c0_i32_0 = arith.constant 0 : i32
    return %c0_i32, %arg0 : i32, i32
  }
  func.func @transform_1(%arg0: i32) -> (i32, i32) {
    %c0_i32 = arith.constant 0 : i32
    %c0_i32_0 = arith.constant 0 : i32
    %c0_i32_1 = arith.constant 0 : i32
    return %c0_i32, %c0_i32_0 : i32, i32
  }
  func.func @transform_2(%arg0: i32) -> (i32, i32) {
    %c0_i32 = arith.constant 0 : i32
    %c0_i32_0 = arith.constant 0 : i32
    %c0_i32_1 = arith.constant 0 : i32
    return %c0_i32, %c0_i32_0 : i32, i32
  }
  func.func @transform_3(%arg0: i32) -> (i32, i32) {
    %c0_i32 = arith.constant 0 : i32
    %c0_i32_0 = arith.constant 0 : i32
    %c0_i32_1 = arith.constant 0 : i32
    return %c0_i32, %c0_i32_0 : i32, i32
  }
  func.func @transform_4(%arg0: i32) -> (i32, i32) {
    %c0_i32 = arith.constant 0 : i32
    %c0_i32_0 = arith.constant 0 : i32
    %c0_i32_1 = arith.constant 0 : i32
    return %c0_i32, %c0_i32_0 : i32, i32
  }
  func.func @transform_5(%arg0: i32) -> (i32, i32) {
    %c0_i32 = arith.constant 0 : i32
    %c0_i32_0 = arith.constant 0 : i32
    %c0_i32_1 = arith.constant 0 : i32
    return %c0_i32, %c0_i32_0 : i32, i32
  }
  func.func @transform_6(%arg0: i32) -> (i32, i32) {
    %c0_i32 = arith.constant 0 : i32
    %c0_i32_0 = arith.constant 0 : i32
    %c0_i32_1 = arith.constant 0 : i32
    return %c0_i32, %c0_i32_0 : i32, i32
  }
  func.func @transform_7(%arg0: i32) -> (i32, i32) {
    %c0_i32 = arith.constant 0 : i32
    %c0_i32_0 = arith.constant 0 : i32
    return %c0_i32, %arg0 : i32, i32
  }
  func.func @transform_8(%arg0: i32) -> (i32, i32) {
    %c0_i32 = arith.constant 0 : i32
    %c0_i32_0 = arith.constant 0 : i32
    return %c0_i32, %arg0 : i32, i32
  }
  func.func @transform_9(%arg0: i32) -> (i32, i32) {
    %c0_i32 = arith.constant 0 : i32
    %c0_i32_0 = arith.constant 0 : i32
    return %c0_i32, %arg0 : i32, i32
  }
  func.func @transform_10(%arg0: i32) -> (i32, i32) {
    %c0_i32 = arith.constant 0 : i32
    %c0_i32_0 = arith.constant 0 : i32
    return %c0_i32, %arg0 : i32, i32
  }
  func.func @transform_11(%arg0: i32) -> (i32, i32) {
    %c0_i32 = arith.constant 0 : i32
    %c0_i32_0 = arith.constant 0 : i32
    return %c0_i32, %arg0 : i32, i32
  }
}

</mosaic_0001>

<llo_original>
// kernel: tpu_custom_call.1
$region0: #{tpu_custom_call.1}
  #allocation0 [shape = 'u32[]', space=smem, size = 0x4, offset = 0x4, fixed_abs, tag = 'smem constant byte address 0x4 - core index']
  #allocation1 [shape = 'u32[72,128]{1,0:T(1,128)}', space=vmem, size = 0x9000, scoped, tag = 'internal scratch']
  %s0 = inlined_call_operand.vmem [shape: bf16[16,128], index: 0, kind: input, shape index: {}]
  %s1 = inlined_call_operand.vmem [shape: bf16[64,16], index: 1, kind: input, shape index: {}]
  %s2 = inlined_call_operand.vmem [shape: f32[64,1], index: 2, kind: input, shape index: {}]
  %s3 = inlined_call_operand.vmem [shape: bf16[64,64], index: 3, kind: input, shape index: {}]
  %s4 = inlined_call_operand.vmem [shape: f32[64,1], index: 4, kind: input, shape index: {}]
  %s5 = inlined_call_operand.vmem [shape: bf16[8,64], index: 5, kind: input, shape index: {}]
  %s6 = inlined_call_operand.vmem [shape: f32[8,1], index: 6, kind: input, shape index: {}]
  %s7 = inlined_call_operand.vmem [shape: s32[1,128], index: 7, kind: input, shape index: {}]
  %s8 = inlined_call_operand.vmem [shape: f32[8,128], index: 8, kind: input, shape index: {}]
  %s9 = inlined_call_operand.hbm [shape: s32[1,128], index: 9, kind: output, shape index: {0}]
  %s10 = inlined_call_operand.hbm [shape: f32[1,128], index: 10, kind: output, shape index: {1}]
  %s11 = inlined_call_operand.hbm [shape: f32[1,128], index: 11, kind: output, shape index: {2}]
  %12 = xla_tuple %s9, %s10, %s11
  %s13 = sld [smem:[#allocation0]]
  $region62: #{tpu_custom_call.1} parent=0
    _
  %s15 = ssub.s32 1, %s13
  %s16 = scalar_select 0, %s15, %s13
  $region1: #{tpu_custom_call.1} parent=0
    #allocation2 [shape = 'u8[512]{0}', space=vmem, size = 0x400, scoped, tag = 'output window, operand 0, single buffered']
    #allocation3 [shape = 's32[1]{0}', space=sflag, size = 0x4, scoped, tag = 'scoped memory for tpu_custom_call.1']
    #allocation4 [shape = 'u8[512]{0}', space=vmem, size = 0x400, scoped, tag = 'output window, operand 1, single buffered']
    #allocation5 [shape = 's32[1]{0}', space=sflag, size = 0x4, scoped, tag = 'scoped memory for tpu_custom_call.1']
    #allocation6 [shape = 'u8[512]{0}', space=vmem, size = 0x400, scoped, tag = 'output window, operand 2, single buffered']
    %17 = vsyncpa [#allocation3], 0
    %18 = vsyncpa [#allocation5], 0
    // Predicated region
    $region2: #{tpu_custom_call.1} parent=1 // pred_check
      _
    $region3: #{tpu_custom_call.1} parent=1 // pred_check_branch
      %20 = sbr.rel (0) target = $region5
    $region4: #{tpu_custom_call.1} parent=1 // pred_region
      _
    $region5: #{tpu_custom_call.1} parent=1 // pred_fallthru
      _
    // Predicated region
    $region6: #{tpu_custom_call.1} parent=1 // pred_check
      _
    $region7: #{tpu_custom_call.1} parent=1 // pred_check_branch
      %22 = sbr.rel (0) target = $region9
    $region8: #{tpu_custom_call.1} parent=1 // pred_region
      _
    $region9: #{tpu_custom_call.1} parent=1 // pred_fallthru
      _
    // Predicated region
    $region10: #{tpu_custom_call.1} parent=1 // pred_check
      _
    $region11: #{tpu_custom_call.1} parent=1 // pred_check_branch
      %24 = sbr.rel (0) target = $region13
    $region12: #{tpu_custom_call.1} parent=1 // pred_region
      _
    $region13: #{tpu_custom_call.1} parent=1 // pred_fallthru
      _
    // Predicated region
    $region14: #{tpu_custom_call.1} parent=1 // pred_check
      _
    $region15: #{tpu_custom_call.1} parent=1 // pred_check_branch
      %26 = sbr.rel (0) target = $region17
    $region16: #{tpu_custom_call.1} parent=1 // pred_region
      _
    $region17: #{tpu_custom_call.1} parent=1 // pred_fallthru
      _
    // Predicated region
    $region18: #{tpu_custom_call.1} parent=1 // pred_check
      _
    $region19: #{tpu_custom_call.1} parent=1 // pred_check_branch
      %28 = sbr.rel (0) target = $region21
    $region20: #{tpu_custom_call.1} parent=1 // pred_region
      _
    $region21: #{tpu_custom_call.1} parent=1 // pred_fallthru
      _
    // Predicated region
    $region22: #{tpu_custom_call.1} parent=1 // pred_check
      _
    $region23: #{tpu_custom_call.1} parent=1 // pred_check_branch
      %30 = sbr.rel (0) target = $region25
    $region24: #{tpu_custom_call.1} parent=1 // pred_region
      _
    $region25: #{tpu_custom_call.1} parent=1 // pred_fallthru
      _
    // Predicated region
    $region26: #{tpu_custom_call.1} parent=1 // pred_check
      _
    $region27: #{tpu_custom_call.1} parent=1 // pred_check_branch
      %32 = sbr.rel (0) target = $region29
    $region28: #{tpu_custom_call.1} parent=1 // pred_region
      _
    $region29: #{tpu_custom_call.1} parent=1 // pred_fallthru
      _
    // Predicated region
    $region30: #{tpu_custom_call.1} parent=1 // pred_check
      _
    $region31: #{tpu_custom_call.1} parent=1 // pred_check_branch
      %34 = sbr.rel (0) target = $region33
    $region32: #{tpu_custom_call.1} parent=1 // pred_region
      _
    $region33: #{tpu_custom_call.1} parent=1 // pred_fallthru
      _
    // Predicated region
    $region34: #{tpu_custom_call.1} parent=1 // pred_check
      _
    $region35: #{tpu_custom_call.1} parent=1 // pred_check_branch
      %36 = sbr.rel (0) target = $region37
    $region36: #{tpu_custom_call.1} parent=1 // pred_region
      _
    $region37: #{tpu_custom_call.1} parent=1 // pred_fallthru
      _
    %v38 = vld [vmem:[%s0] sm:$0xf]
    %v39 = vld [vmem:[%s0 + $0x4] sm:$0xf]
    %v40 = vld [vmem:[%s1] sm:$0xf]
    %v41 = vld [vmem:[%s1 + $0x4] sm:$0xf]
    %v42 = vld [vmem:[%s1 + $0x8] sm:$0xf]
    %v43 = vld [vmem:[%s1 + $0xc] sm:$0xf]
    %v44 = vld [vmem:[%s1 + $0x10] sm:$0xf]
    %v45 = vld [vmem:[%s1 + $0x14] sm:$0xf]
    %v46 = vld [vmem:[%s1 + $0x18] sm:$0xf]
    %v47 = vld [vmem:[%s1 + $0x1c] sm:$0xf]
    %v48 = vld [vmem:[%s2] sm:$0xff]
    %v49 = vld [vmem:[%s2 + $0x8] sm:$0xff]
    %v50 = vld [vmem:[%s2 + $0x10] sm:$0xff]
    %v51 = vld [vmem:[%s2 + $0x18] sm:$0xff]
    %v52 = vld [vmem:[%s2 + $0x20] sm:$0xff]
    %v53 = vld [vmem:[%s2 + $0x28] sm:$0xff]
    %v54 = vld [vmem:[%s2 + $0x30] sm:$0xff]
    %v55 = vld [vmem:[%s2 + $0x38] sm:$0xff]
    %57 = vset.pattern.permute.xlu0 0
    %58 = vperm.xlu0 %57, %v48
    %v59 = vpop.permute.xlu0 %58
    %62 = vset.pattern.permute.xlu0 0
    %63 = vperm.xlu0 %62, %v49
    %v64 = vpop.permute.xlu0 %63
    %67 = vset.pattern.permute.xlu0 0
    %68 = vperm.xlu0 %67, %v50
    %v69 = vpop.permute.xlu0 %68
    %72 = vset.pattern.permute.xlu0 0
    %73 = vperm.xlu0 %72, %v51
    %v74 = vpop.permute.xlu0 %73
    %77 = vset.pattern.permute.xlu0 0
    %78 = vperm.xlu0 %77, %v52
    %v79 = vpop.permute.xlu0 %78
    %82 = vset.pattern.permute.xlu0 0
    %83 = vperm.xlu0 %82, %v53
    %v84 = vpop.permute.xlu0 %83
    %87 = vset.pattern.permute.xlu0 0
    %88 = vperm.xlu0 %87, %v54
    %v89 = vpop.permute.xlu0 %88
    %92 = vset.pattern.permute.xlu0 0
    %93 = vperm.xlu0 %92, %v55
    %v94 = vpop.permute.xlu0 %93
    %v104 = vunpack.c.l.b16 %v40
    %v105 = vunpack.c.l.b16 %v41
    %v106 = vunpack.c.l.b16 %v42
    %v107 = vunpack.c.l.b16 %v43
    %v108 = vunpack.c.l.b16 %v44
    %v109 = vunpack.c.l.b16 %v45
    %v110 = vunpack.c.l.b16 %v46
    %v111 = vunpack.c.l.b16 %v47
    %v112 = vpack.c.b16 %v105, %v104
    %v113 = vpack.c.b16 %v107, %v106
    %v114 = vpack.c.b16 %v109, %v108
    %v115 = vpack.c.b16 %v111, %v110
    %v118 = vunpack.c.l.b16 %v38
    %v119 = vunpack.c.l.b16 %v39
    %v120 = vpack.c.b16 %v119, %v118
    %vm122 = vcmask 130048
    %v124 = vsel %vm122, %v112, 0
    %v127 = vsel %vm122, %v113, 0
    %v130 = vsel %vm122, %v114, 0
    %v133 = vsel %vm122, %v115, 0
    %135 = vmatpush.bf16.msra.mxu0 0
    %136 = vmatpush.bf16.msra.mxu0 0
    %137 = vmatpush.bf16.msra.mxu0 0
    %138 = vmatpush.bf16.msra.mxu0 0
    %139 = vmatpush.bf16.msra.mxu0 0
    %140 = vmatpush.bf16.msra.mxu0 0
    %141 = vmatpush.bf16.msra.mxu0 0
    %142 = vmatpush.bf16.msra.mxu0 %v120
    %143 = vmatmul.bf16.gmra.mxu0 %v124
    %v144 = vpop.f32.mrf.mxu0
    %v145 = vadd.f32 %v59, %v144
    %v146 = vpop.f32.mrf.mxu0
    %v147 = vadd.f32 %v64, %v146
    %148 = vmatmul.bf16.gmra.mxu0 %v127
    %v149 = vpop.f32.mrf.mxu0
    %v150 = vadd.f32 %v69, %v149
    %v151 = vpop.f32.mrf.mxu0
    %v152 = vadd.f32 %v74, %v151
    %153 = vmatmul.bf16.gmra.mxu0 %v130
    %v154 = vpop.f32.mrf.mxu0
    %v155 = vadd.f32 %v79, %v154
    %v156 = vpop.f32.mrf.mxu0
    %v157 = vadd.f32 %v84, %v156
    %158 = vmatmul.bf16.gmra.mxu0 %v133
    %v159 = vpop.f32.mrf.mxu0
    %v160 = vadd.f32 %v89, %v159
    %v161 = vpop.f32.mrf.mxu0
    %v162 = vadd.f32 %v94, %v161
    %163 = vdwg.mxu0
    %v164 = vtanh.pop %v145
    %v165 = vtanh.pop %v147
    %v166 = vtanh.pop %v150
    %v167 = vtanh.pop %v152
    %v168 = vtanh.pop %v155
    %v169 = vtanh.pop %v157
    %v170 = vtanh.pop %v160
    %v171 = vtanh.pop %v162
    %v172 = vld [vmem:[%s3] sm:$0xf]
    %v173 = vld [vmem:[%s3 + $0x4] sm:$0xf]
    %v174 = vld [vmem:[%s3 + $0x8] sm:$0xf]
    %v175 = vld [vmem:[%s3 + $0xc] sm:$0xf]
    %v176 = vld [vmem:[%s3 + $0x10] sm:$0xf]
    %v177 = vld [vmem:[%s3 + $0x14] sm:$0xf]
    %v178 = vld [vmem:[%s3 + $0x18] sm:$0xf]
    %v179 = vld [vmem:[%s3 + $0x1c] sm:$0xf]
    %v180 = vpack.c.bf16 %v165, %v164
    %v181 = vpack.c.bf16 %v167, %v166
    %v182 = vpack.c.bf16 %v169, %v168
    %v183 = vpack.c.bf16 %v171, %v170
    %v184 = vld [vmem:[%s4] sm:$0xff]
    %v185 = vld [vmem:[%s4 + $0x8] sm:$0xff]
    %v186 = vld [vmem:[%s4 + $0x10] sm:$0xff]
    %v187 = vld [vmem:[%s4 + $0x18] sm:$0xff]
    %v188 = vld [vmem:[%s4 + $0x20] sm:$0xff]
    %v189 = vld [vmem:[%s4 + $0x28] sm:$0xff]
    %v190 = vld [vmem:[%s4 + $0x30] sm:$0xff]
    %v191 = vld [vmem:[%s4 + $0x38] sm:$0xff]
    %193 = vset.pattern.permute.xlu0 0
    %194 = vperm.xlu0 %193, %v184
    %v195 = vpop.permute.xlu0 %194
    %198 = vset.pattern.permute.xlu0 0
    %199 = vperm.xlu0 %198, %v185
    %v200 = vpop.permute.xlu0 %199
    %203 = vset.pattern.permute.xlu0 0
    %204 = vperm.xlu0 %203, %v186
    %v205 = vpop.permute.xlu0 %204
    %208 = vset.pattern.permute.xlu0 0
    %209 = vperm.xlu0 %208, %v187
    %v210 = vpop.permute.xlu0 %209
    %213 = vset.pattern.permute.xlu0 0
    %214 = vperm.xlu0 %213, %v188
    %v215 = vpop.permute.xlu0 %214
    %218 = vset.pattern.permute.xlu0 0
    %219 = vperm.xlu0 %218, %v189
    %v220 = vpop.permute.xlu0 %219
    %223 = vset.pattern.permute.xlu0 0
    %224 = vperm.xlu0 %223, %v190
    %v225 = vpop.permute.xlu0 %224
    %228 = vset.pattern.permute.xlu0 0
    %229 = vperm.xlu0 %228, %v191
    %v230 = vpop.permute.xlu0 %229
    %v240 = vunpack.c.l.b16 %v172
    %v241 = vunpack.c.l.b16 %v173
    %v242 = vunpack.c.l.b16 %v174
    %v243 = vunpack.c.l.b16 %v175
    %v244 = vunpack.c.l.b16 %v176
    %v245 = vunpack.c.l.b16 %v177
    %v246 = vunpack.c.l.b16 %v178
    %v247 = vunpack.c.l.b16 %v179
    %v248 = vpack.c.b16 %v241, %v240
    %v249 = vpack.c.b16 %v243, %v242
    %v250 = vpack.c.b16 %v245, %v244
    %v251 = vpack.c.b16 %v247, %v246
    %vm252 = vcmask 523264
    %v254 = vsel %vm252, %v248, 0
    %v257 = vsel %vm252, %v249, 0
    %v260 = vsel %vm252, %v250, 0
    %v263 = vsel %vm252, %v251, 0
    %265 = vmatpush.bf16.msra.mxu0 0
    %266 = vmatpush.bf16.msra.mxu0 0
    %267 = vmatpush.bf16.msra.mxu0 0
    %268 = vmatpush.bf16.msra.mxu0 0
    %269 = vmatpush.bf16.msra.mxu0 %v183
    %270 = vmatpush.bf16.msra.mxu0 %v182
    %271 = vmatpush.bf16.msra.mxu0 %v181
    %272 = vmatpush.bf16.msra.mxu0 %v180
    %273 = vmatmul.bf16.gmra.mxu0 %v254
    %v274 = vpop.f32.mrf.mxu0
    %v275 = vadd.f32 %v195, %v274
    %v276 = vpop.f32.mrf.mxu0
    %v277 = vadd.f32 %v200, %v276
    %278 = vmatmul.bf16.gmra.mxu0 %v257
    %v279 = vpop.f32.mrf.mxu0
    %v280 = vadd.f32 %v205, %v279
    %v281 = vpop.f32.mrf.mxu0
    %v282 = vadd.f32 %v210, %v281
    %283 = vmatmul.bf16.gmra.mxu0 %v260
    %v284 = vpop.f32.mrf.mxu0
    %v285 = vadd.f32 %v215, %v284
    %v286 = vpop.f32.mrf.mxu0
    %v287 = vadd.f32 %v220, %v286
    %288 = vmatmul.bf16.gmra.mxu0 %v263
    %v289 = vpop.f32.mrf.mxu0
    %v290 = vadd.f32 %v225, %v289
    %v291 = vpop.f32.mrf.mxu0
    %v292 = vadd.f32 %v230, %v291
    %293 = vdwg.mxu0
    %v294 = vtanh.pop %v275
    %v295 = vtanh.pop %v277
    %v296 = vtanh.pop %v280
    %v297 = vtanh.pop %v282
    %v298 = vtanh.pop %v285
    %v299 = vtanh.pop %v287
    %v300 = vtanh.pop %v290
    %v301 = vtanh.pop %v292
    %v302 = vld [vmem:[%s5] sm:$0xf]
    %v303 = vpack.c.bf16 %v295, %v294
    %v304 = vpack.c.bf16 %v297, %v296
    %v305 = vpack.c.bf16 %v299, %v298
    %v306 = vpack.c.bf16 %v301, %v300
    %v307 = vld [vmem:[%s6] sm:$0xff]
    %309 = vset.pattern.permute.xlu0 0
    %310 = vperm.xlu0 %309, %v307
    %v311 = vpop.permute.xlu0 %310
    %v314 = vsel %vm252, %v302, 0
    %316 = vmatpush.bf16.msra.mxu0 0
    %317 = vmatpush.bf16.msra.mxu0 0
    %318 = vmatpush.bf16.msra.mxu0 0
    %319 = vmatpush.bf16.msra.mxu0 0
    %320 = vmatpush.bf16.msra.mxu0 %v306
    %321 = vmatpush.bf16.msra.mxu0 %v305
    %322 = vmatpush.bf16.msra.mxu0 %v304
    %323 = vmatpush.bf16.msra.mxu0 %v303
    %324 = vmatmul.bf16.gmra.mxu0 %v314
    %v325 = vpop.f32.mrf.mxu0
    %v326 = vadd.f32 %v311, %v325
    %v327 = vpop.f32.mrf.mxu0
    %328 = vdwg.mxu0
    %v329 = vrot.slane %v326, 4
    %v330 = vmax.f32 %v326, %v329
    %v331 = vrot.slane %v330, 2
    %v332 = vmax.f32 %v330, %v331
    %v333 = vrot.slane %v332, 1
    %v334 = vmax.f32 %v332, %v333
    %v335 = vsub.f32 %v326, %v334
    %v336 = vmul.f32 %v335, 1.442695
    %v337 = vpow.pop %v336
    %v338 = vrot.slane %v337, 4
    %v339 = vadd.f32 %v337, %v338
    %v340 = vrot.slane %v339, 2
    %v341 = vadd.f32 %v339, %v340
    %v342 = vrot.slane %v341, 1
    %v343 = vadd.f32 %v341, %v342
    %v344 = vlog2.pop %v343
    %v345 = vmul.f32 %v344, 0.6931472
    %v346 = vsub.f32 %v335, %v345
    %v347 = vlaneseq
    %v348 = vshrl.u32 %v347, 7
    %v349 = vld [vmem:[%s8] sm:$0xff]
    %v350 = vadd.f32 %v346, %v349
    %v351 = vrot.slane %v350, 4
    %v352 = vmax.f32 %v350, %v351
    %v353 = vrot.slane %v352, 2
    %v354 = vmax.f32 %v352, %v353
    %v355 = vrot.slane %v354, 1
    %v356 = vmax.f32 %v354, %v355
    %vm357 = vcmp.ge.f32.partialorder %v350, %v356
    %v358 = vsel %vm357, %v348, 8
    %v359 = vrot.slane %v358, 4
    %vm360 = vcmp.lt.s32.totalorder %v358, %v359
    %v361 = vsel %vm360, %v358, %v359
    %v362 = vrot.slane %v361, 2
    %vm363 = vcmp.lt.s32.totalorder %v361, %v362
    %v364 = vsel %vm363, %v361, %v362
    %v365 = vrot.slane %v364, 1
    %vm366 = vcmp.lt.s32.totalorder %v364, %v365
    %v367 = vsel %vm366, %v364, %v365
    %vm368 = vcmp.eq.s32.totalorder %v348, %v367
    %v369 = vsel %vm368, %v346, 0.0
    %v370 = vrot.slane %v369, 4
    %v371 = vadd.f32 %v369, %v370
    %v372 = vrot.slane %v371, 2
    %v373 = vadd.f32 %v371, %v372
    %v374 = vrot.slane %v373, 1
    %v375 = vadd.f32 %v373, %v374
    %v376 = vld [vmem:[%s7] sm:$0x1]
    %v377 = vperm.slane %v376, 0
    %vm378 = vcmp.eq.s32.totalorder %v348, %v377
    %v379 = vsel %vm378, %v346, 0.0
    %v380 = vrot.slane %v379, 4
    %v381 = vadd.f32 %v379, %v380
    %v382 = vrot.slane %v381, 2
    %v383 = vadd.f32 %v381, %v382
    %v384 = vrot.slane %v383, 1
    %v385 = vadd.f32 %v383, %v384
    %386 = vst [vmem:[#allocation2] sm:$0x1] %v367
    %387 = vst [vmem:[#allocation4] sm:$0x1] %v375
    %388 = vst [vmem:[#allocation6] sm:$0x1] %v385
    // Predicated region
    $region38: #{tpu_custom_call.1} parent=1 // pred_check
      _
    $region39: #{tpu_custom_call.1} parent=1 // pred_check_branch
      %390 = sbr.rel (0) target = $region41
    $region40: #{tpu_custom_call.1} parent=1 // pred_region
      %392 = vsyncadd [#allocation3], 0
      %s394 = sshll.u32 [#allocation2], 4
      %s395 = int_to_ptr.vmem [resolvable:$true] %s394
      %s396 = sshll.u32 %s9, 4
      %s397 = int_to_ptr.hbm [resolvable:$true] %s396
      %399 = dma.vmem_to_hbm [thread:$0]  %s395, 16, %s397, [#allocation3]
    $region41: #{tpu_custom_call.1} parent=1 // pred_fallthru
      _
    // Predicated region
    $region42: #{tpu_custom_call.1} parent=1 // pred_check
      _
    $region43: #{tpu_custom_call.1} parent=1 // pred_check_branch
      %401 = sbr.rel (0) target = $region45
    $region44: #{tpu_custom_call.1} parent=1 // pred_region
      %403 = vsyncadd [#allocation5], 0
      %s405 = sshll.u32 [#allocation4], 4
      %s406 = int_to_ptr.vmem [resolvable:$true] %s405
      %s407 = sshll.u32 %s10, 4
      %s408 = int_to_ptr.hbm [resolvable:$true] %s407
      %410 = dma.vmem_to_hbm [thread:$0]  %s406, 16, %s408, [#allocation5]
    $region45: #{tpu_custom_call.1} parent=1 // pred_fallthru
      _
    // Predicated region
    $region46: #{tpu_custom_call.1} parent=1 // pred_check
      _
    $region47: #{tpu_custom_call.1} parent=1 // pred_check_branch
      %412 = sbr.rel (0) target = $region49
    $region48: #{tpu_custom_call.1} parent=1 // pred_region
      %414 = vsyncadd [#allocation5], 0
      %s416 = sshll.u32 [#allocation6], 4
      %s417 = int_to_ptr.vmem [resolvable:$true] %s416
      %s418 = sshll.u32 %s11, 4
      %s419 = int_to_ptr.hbm [resolvable:$true] %s418
      %421 = dma.vmem_to_hbm [thread:$0]  %s417, 16, %s419, [#allocation5]
    $region49: #{tpu_custom_call.1} parent=1 // pred_fallthru
      _
    // Predicated region
    $region50: #{tpu_custom_call.1} parent=1 // pred_check
      _
    $region51: #{tpu_custom_call.1} parent=1 // pred_check_branch
      %423 = sbr.rel (0) target = $region53
    $region52: #{tpu_custom_call.1} parent=1 // pred_region
      %425 = dma.done [#allocation3], 16
    $region53: #{tpu_custom_call.1} parent=1 // pred_fallthru
      _
    // Predicated region
    $region54: #{tpu_custom_call.1} parent=1 // pred_check
      _
    $region55: #{tpu_custom_call.1} parent=1 // pred_check_branch
      %427 = sbr.rel (0) target = $region57
    $region56: #{tpu_custom_call.1} parent=1 // pred_region
      %429 = dma.done [#allocation5], 16
    $region57: #{tpu_custom_call.1} parent=1 // pred_fallthru
      _
    // Predicated region
    $region58: #{tpu_custom_call.1} parent=1 // pred_check
      _
    $region59: #{tpu_custom_call.1} parent=1 // pred_check_branch
      %431 = sbr.rel (0) target = $region61
    $region60: #{tpu_custom_call.1} parent=1 // pred_region
      %433 = dma.done [#allocation5], 16
    $region61: #{tpu_custom_call.1} parent=1 // pred_fallthru
      _
    %434 = vsyncpa [#allocation3], 1
    %435 = vsyncpa [#allocation5], 1

</llo_original>
